<compile_context>
chip_gen: v5e
topology: v5e:2x2
jax: 0.10.0
libtpu: 0.0.40
codegen_flags: <defaults>
</compile_context>

<pallas_src>
import jax
import jax.numpy as jnp
from jax.experimental import pallas as pl
from jax.experimental.pallas import tpu as pltpu


# ----------------------------------------------------------------------------
# Copy path 1: single HBM->HBM DMA (preferred when a fresh buffer is needed).
# ----------------------------------------------------------------------------
def _identity_dma_copy_kernel(x_hbm, o_hbm, sem):
    # One whole-array DMA from the input HBM buffer to the output HBM buffer.
    # Zero compute, no VMEM staging, no grid -> near HBM-roofline streaming.
    cp = pltpu.make_async_copy(x_hbm, o_hbm, sem)
    cp.start()
    cp.wait()


def _identity_dma_copy(x: jax.Array) -> jax.Array:
    """Bit-exact copy of x via one HBM->HBM DMA inside a pallas_call."""
    if x.size == 0:
        return x
    return pl.pallas_call(
        _identity_dma_copy_kernel,
        out_shape=jax.ShapeDtypeStruct(x.shape, x.dtype),
        in_specs=[pl.BlockSpec(memory_space=pl.ANY)],
        out_specs=pl.BlockSpec(memory_space=pl.ANY),
        scratch_shapes=[pltpu.SemaphoreType.DMA(())],
    )(x)


# ----------------------------------------------------------------------------
# Copy path 2: aliased no-op (output shares the input buffer; zero data moved
# inside the kernel).  With caller-side donation this makes the "copy" free.
# ----------------------------------------------------------------------------
def _identity_alias_kernel(x_hbm, o_hbm):
    # Output is aliased to the input buffer (input_output_aliases={0: 0});
    # the data is already in place, so there is nothing to do.
    del x_hbm, o_hbm


def _identity_alias(x: jax.Array) -> jax.Array:
    if x.size == 0:
        return x
    return pl.pallas_call(
        _identity_alias_kernel,
        out_shape=jax.ShapeDtypeStruct(x.shape, x.dtype),
        in_specs=[pl.BlockSpec(memory_space=pl.ANY)],
        out_specs=pl.BlockSpec(memory_space=pl.ANY),
        input_output_aliases={0: 0},
    )(x)


# ----------------------------------------------------------------------------
# IdentityMap.forward equivalent.
# ----------------------------------------------------------------------------
def identity_map(
    x: jax.Array,
    *args,
    force_copy: bool = False,
    prefer_alias: bool = False,
    **kwargs,
) -> jax.Array:
    """Pallas implementation of IdentityMap.forward: returns x unchanged.

    Default path is a zero-cost `return x` (the recommended production path).
    force_copy=True routes through a Pallas kernel:
      * prefer_alias=False -> single HBM->HBM DMA copy (fresh output buffer).
      * prefer_alias=True  -> input_output_aliases no-op (free if the caller
        donates the input buffer; XLA inserts a defensive copy otherwise).
    """
    del args, kwargs  # forward ignores them, just like the PyTorch module
    if not force_copy:
        return x
    if prefer_alias:
        return _identity_alias(x)
    return _identity_dma_copy(x)


# config property of the module — pure Python metadata, no compute.
IDENTITY_MAP_CONFIG = {"mm_projector_type": "identity"}


if __name__ == "__main__":
    key = jax.random.PRNGKey(0)

    # Small projector-style input: (batch=2, seq=8, hidden=32).
    x = jax.random.normal(key, (2, 8, 32), dtype=jnp.float32)

    # Fast path: literal identity (the recommended production path).
    y_fast = identity_map(x)
    jax.block_until_ready(y_fast)
    assert y_fast.shape == x.shape and y_fast.dtype == x.dtype
    assert jnp.array_equal(y_fast, x)

    # HBM->HBM DMA copy path on the toy shape.
    y_copy = identity_map(x, force_copy=True)
    jax.block_until_ready(y_copy)
    assert y_copy.shape == x.shape and y_copy.dtype == x.dtype
    assert jnp.array_equal(y_copy, x)

    # DMA copy on an unaligned shape: no padding / reshape / slice needed —
    # the whole-ref DMA is layout-agnostic.
    x2 = jax.random.normal(jax.random.PRNGKey(1), (3, 7, 33), dtype=jnp.float32)
    y2 = identity_map(x2, force_copy=True)
    jax.block_until_ready(y2)
    assert y2.shape == x2.shape and y2.dtype == x2.dtype
    assert jnp.array_equal(y2, x2)

    # DMA copy on a bf16 input (dtype-agnostic, no tile-size tuning needed).
    x3 = jax.random.normal(jax.random.PRNGKey(2), (2, 8, 32), dtype=jnp.bfloat16)
    y3 = identity_map(x3, force_copy=True)
    jax.block_until_ready(y3)
    assert y3.shape == x3.shape and y3.dtype == x3.dtype
    assert jnp.array_equal(y3, x3)

    # Aliased no-op path (zero bytes moved inside the kernel).
    y4 = identity_map(x, force_copy=True, prefer_alias=True)
    jax.block_until_ready(y4)
    assert y4.shape == x.shape and y4.dtype == x.dtype
    assert jnp.array_equal(y4, x)

    print("KERNEL_OK")
</pallas_src>

<mosaic_0001>
module attributes {stable_mosaic.version = 11 : i64} {
  func.func @_identity_dma_copy_kernel(%arg0: memref<2x8x32xf32, #tpu.memory_space<any>>, %arg1: memref<2x8x32xf32, #tpu.memory_space<any>>, %arg2: memref<!tpu.dma_semaphore, #tpu.memory_space<semaphore_mem>>) attributes {dimension_semantics = [], scalar_prefetch = 0 : i64, scratch_operands = 1 : i64, tpu.core_type = #tpu.core_type<tc>} {
    tpu.enqueue_dma source(%arg0 : memref<2x8x32xf32, #tpu.memory_space<any>>) target(%arg1 : memref<2x8x32xf32, #tpu.memory_space<any>>) target_semaphore(%arg2 : memref<!tpu.dma_semaphore, #tpu.memory_space<semaphore_mem>>)
    tpu.wait_dma2 semaphore(%arg2 : memref<!tpu.dma_semaphore, #tpu.memory_space<semaphore_mem>>) src(%arg0 : memref<2x8x32xf32, #tpu.memory_space<any>>) dst(%arg1 : memref<2x8x32xf32, #tpu.memory_space<any>>)
    return
  }
}

</mosaic_0001>

<llo_original>
// kernel: tpu_custom_call.1
$region0: #{tpu_custom_call.1}
  #allocation0 [shape = 'u32[]', space=smem, size = 0x4, offset = 0x4, fixed_abs, tag = 'smem constant byte address 0x4 - core index']
  #allocation1 [shape = 'u32[72,128]{1,0:T(1,128)}', space=vmem, size = 0x9000, scoped, tag = 'internal scratch']
  #allocation2 [shape = 's32[1]{0}', space=sflag, size = 0x4, scoped, tag = 'scratch operand']
  #allocation3 [shape = 's32[]', space=sflag, size = 0x4, offset = 0, fixed_abs, tag = 'sflag constant byte address 0x0 - dummy sync flag']
  #allocation4 [shape = 'u32[0]{0}', space=smem, size = 0, offset = 0, fixed_abs, tag = 'smem constant byte address 0x0 - null']
  %s0 = inlined_call_operand.hbm [shape: f32[2,8,32], index: 0, kind: input, shape index: {}]
  %s1 = inlined_call_operand.hbm [shape: f32[2,8,32], index: 1, kind: output, shape index: {}]
  %s2 = sld [smem:[#allocation0]]
  $region2: #{tpu_custom_call.1} parent=0
    _
  %s4 = ssub.s32 1, %s2
  %s5 = scalar_select 0, %s4, %s2
  %s7 = sshll.u32 1, 14
  %s8 = sxor.u32 4294967295, %s7
  %s10 = sshll.u32 %s0, 4
  %s11 = int_to_ptr.hbm [resolvable:$true] %s10
  %s12 = sshll.u32 %s1, 4
  %s13 = int_to_ptr.hbm [resolvable:$true] %s12
  %16 = dma.general %s11, 256, %s13, [#allocation2], [#allocation3], [#allocation4], 0, 0
  %s17 = smul.u32 2, 8
  %s18 = smul.u32 %s17, 1
  %s19 = sshll.u32 %s18, 4
  %20 = dma.done [#allocation2], %s19
  %21 = vsyncmov [#allocation2]
  %s22 = vpop.sfrf %21
  %p23 = scmp.eq.s32.totalorder %s22, 0
  %p24 = pneg %p23
  %26 = shalt.err (%p24)

</llo_original>
